<compile_context>
chip_gen: v6e
topology: v6e:2x2x1
jax: 0.10.0
libtpu: 0.0.40
codegen_flags: <defaults>
</compile_context>

<pallas_src>
import jax
import jax.numpy as jnp
from jax.experimental import pallas as pl
from jax.experimental.pallas import tpu as pltpu

_LANES = 128


def _bayes_regressor_kernel(x_ref, w1_ref, b1_ref, w2_ref, b2_ref, o_ref):
    """All S Monte-Carlo draws in one shot.

    x_ref : [B, D_in]     f32  activations (shared across draws)
    w1_ref: [D_in, S*H]   f32  layer-1 weights, draws packed along columns
    b1_ref: [1, S*H]      f32
    w2_ref: [S*H, d_pad]  f32  block-diagonal layer-2 weights (lane-dense)
    b2_ref: [1, d_pad]    f32
    o_ref : [B, d_pad]    f32  lane s*d_out + o  ==  draw s, output column o
    """
    h = jnp.dot(x_ref[...], w1_ref[...], preferred_element_type=jnp.float32)
    h = jnp.maximum(h + b1_ref[...], 0.0)                     # bias + ReLU
    out = jnp.dot(h, w2_ref[...], preferred_element_type=jnp.float32)
    o_ref[...] = out + b2_ref[...]


def bayesian_regressor_forward(x, w1t, b1, w2t, b2):
    """Run all S Monte-Carlo draws of the Bayesian MLP in one kernel call.

    x  : [B, D_in]       activations
    w1t: [S, D_in, H]    layer-1 weights, [in, out] layout per draw
    b1 : [S, H]
    w2t: [S, H, D_out]   layer-2 weights, [in, out] layout per draw
    b2 : [S, D_out]
    returns: [S, B, D_out] float32
    """
    B, d_in = x.shape
    S, _, hidden = w1t.shape
    d_out = w2t.shape[-1]
    d_pad = max(_LANES, pl.cdiv(S * d_out, _LANES) * _LANES)

    f32 = jnp.float32
    x_f = x.astype(f32)

    # Layer 1: pack the S draws along the output (lane) dim -> [D_in, S*H].
    w1_packed = jnp.transpose(w1t.astype(f32), (1, 0, 2)).reshape(d_in, S * hidden)
    b1_packed = b1.astype(f32).reshape(1, S * hidden)

    # Layer 2: block-diagonal [S*H, S*d_out]; off-diagonal blocks are exact
    # zeros (built from an identity mask) so draws cannot leak into each other.
    # Pad the lane dim to 128 so the kernel's store is a full-lane vst.
    eye = jnp.eye(S, dtype=f32)
    w2_bd = (eye[:, None, :, None] * w2t.astype(f32)[:, :, None, :]).reshape(
        S * hidden, S * d_out)
    w2_bd = jnp.pad(w2_bd, ((0, 0), (0, d_pad - S * d_out)))
    b2_packed = jnp.pad(b2.astype(f32).reshape(1, S * d_out),
                        ((0, 0), (0, d_pad - S * d_out)))

    out_padded = pl.pallas_call(
        _bayes_regressor_kernel,
        out_shape=jax.ShapeDtypeStruct((B, d_pad), f32),
        # Everything is tiny -> whole arrays VMEM-resident, no grid, no
        # per-step DMA descriptors.
        in_specs=[pl.BlockSpec(memory_space=pltpu.MemorySpace.VMEM)] * 5,
        out_specs=pl.BlockSpec(memory_space=pltpu.MemorySpace.VMEM),
    )(x_f, w1_packed, b1_packed, w2_bd, b2_packed)

    # Lane s*d_out + o  ->  out[s, b, o].
    return out_padded[:, :S * d_out].reshape(B, S, d_out).transpose(1, 0, 2)


def sample_bayesian_linear_params(key, in_features, out_features, n_samples,
                                  posterior_mu_std=0.1, posterior_rho_init=-7.0):
    """blitz-style BayesianLinear sampling: w = mu + softplus(rho) * eps.

    mu/rho are the (shared) variational posterior parameters; one eps per
    Monte-Carlo draw.  Weights are produced directly in [in, out] layout so
    the forward path never transposes.
    """
    k_mu_w, k_rho_w, k_mu_b, k_rho_b, k_eps_w, k_eps_b = jax.random.split(key, 6)
    w_mu = posterior_mu_std * jax.random.normal(
        k_mu_w, (in_features, out_features), dtype=jnp.float32)
    w_rho = posterior_rho_init + 0.1 * jax.random.normal(
        k_rho_w, (in_features, out_features), dtype=jnp.float32)
    b_mu = posterior_mu_std * jax.random.normal(
        k_mu_b, (out_features,), dtype=jnp.float32)
    b_rho = posterior_rho_init + 0.1 * jax.random.normal(
        k_rho_b, (out_features,), dtype=jnp.float32)

    eps_w = jax.random.normal(k_eps_w, (n_samples, in_features, out_features),
                              dtype=jnp.float32)
    eps_b = jax.random.normal(k_eps_b, (n_samples, out_features),
                              dtype=jnp.float32)

    w = w_mu[None] + jax.nn.softplus(w_rho)[None] * eps_w      # [S, in, out]
    b = b_mu[None] + jax.nn.softplus(b_rho)[None] * eps_b      # [S, out]
    return w, b


if __name__ == "__main__":
    key = jax.random.PRNGKey(0)
    k_x, k_l1, k_l2 = jax.random.split(key, 3)

    # Small shapes consistent with BayesianRegressor(input_dim, hidden_dim,
    # output_dim) applied to [batch, input_dim]; S Monte-Carlo weight draws.
    batch, input_dim, hidden_dim, output_dim = 8, 16, 32, 1
    n_mc_samples = 8

    x = jax.random.normal(k_x, (batch, input_dim), dtype=jnp.float32)
    w1t, b1 = sample_bayesian_linear_params(k_l1, input_dim, hidden_dim,
                                            n_mc_samples)
    w2t, b2 = sample_bayesian_linear_params(k_l2, hidden_dim, output_dim,
                                            n_mc_samples)

    out = bayesian_regressor_forward(x, w1t, b1, w2t, b2)
    out = jax.block_until_ready(out)
    assert out.shape == (n_mc_samples, batch, output_dim)

    # Pure-JAX f32 reference (highest precision); tolerance leaves headroom
    # for the MXU's default f32 matmul precision while still catching any
    # cross-draw leakage from the block-diagonal packing.
    h_ref = jnp.maximum(
        jnp.einsum("bd,sdh->sbh", x, w1t,
                   precision=jax.lax.Precision.HIGHEST) + b1[:, None, :], 0.0)
    ref = jnp.einsum("sbh,sho->sbo", h_ref, w2t,
                     precision=jax.lax.Precision.HIGHEST) + b2[:, None, :]

    max_err = float(jnp.max(jnp.abs(out - ref)))
    assert jnp.allclose(out, ref, atol=5e-3, rtol=5e-3), max_err

    print("KERNEL_OK")
</pallas_src>

<mosaic_0001>
module attributes {stable_mosaic.version = 11 : i64} {
  func.func @_bayes_regressor_kernel(%arg0: memref<8x16xf32, #tpu.memory_space<vmem>>, %arg1: memref<16x256xf32, #tpu.memory_space<vmem>>, %arg2: memref<1x256xf32, #tpu.memory_space<vmem>>, %arg3: memref<256x128xf32, #tpu.memory_space<vmem>>, %arg4: memref<1x128xf32, #tpu.memory_space<vmem>>, %arg5: memref<8x128xf32, #tpu.memory_space<vmem>>) attributes {dimension_semantics = [], scalar_prefetch = 0 : i64, scratch_operands = 0 : i64, tpu.core_type = #tpu.core_type<tc>} {
    %c0 = arith.constant 0 : index
    %c0_0 = arith.constant 0 : index
    %0 = vector.load %arg0[%c0, %c0_0] : memref<8x16xf32, #tpu.memory_space<vmem>>, vector<8x16xf32>
    %c0_1 = arith.constant 0 : index
    %c0_2 = arith.constant 0 : index
    %1 = vector.load %arg1[%c0_1, %c0_2] : memref<16x256xf32, #tpu.memory_space<vmem>>, vector<16x256xf32>
    %cst = arith.constant dense<0.000000e+00> : vector<8x256xf32>
    %2 = tpu.matmul %0, %1, %cst {dimension_numbers = #tpu.dot_dimension_numbers<[1], [0], [0], [1], [0, 0, 1, 1], [], []>} : vector<8x16xf32>, vector<16x256xf32>, vector<8x256xf32> -> vector<8x256xf32>
    %c0_3 = arith.constant 0 : index
    %c0_4 = arith.constant 0 : index
    %3 = vector.load %arg2[%c0_3, %c0_4] : memref<1x256xf32, #tpu.memory_space<vmem>>, vector<1x256xf32>
    %4 = vector.broadcast %3 : vector<1x256xf32> to vector<8x256xf32>
    %5 = arith.addf %2, %4 : vector<8x256xf32>
    %cst_5 = arith.constant 0.000000e+00 : f32
    %6 = vector.broadcast %cst_5 : f32 to vector<8x256xf32>
    %7 = arith.maximumf %5, %6 : vector<8x256xf32>
    %c0_6 = arith.constant 0 : index
    %c0_7 = arith.constant 0 : index
    %8 = vector.load %arg3[%c0_6, %c0_7] : memref<256x128xf32, #tpu.memory_space<vmem>>, vector<256x128xf32>
    %cst_8 = arith.constant dense<0.000000e+00> : vector<8x128xf32>
    %9 = tpu.matmul %7, %8, %cst_8 {dimension_numbers = #tpu.dot_dimension_numbers<[1], [0], [0], [1], [0, 0, 1, 1], [], []>} : vector<8x256xf32>, vector<256x128xf32>, vector<8x128xf32> -> vector<8x128xf32>
    %c0_9 = arith.constant 0 : index
    %c0_10 = arith.constant 0 : index
    %10 = vector.load %arg4[%c0_9, %c0_10] : memref<1x128xf32, #tpu.memory_space<vmem>>, vector<1x128xf32>
    %11 = vector.broadcast %10 : vector<1x128xf32> to vector<8x128xf32>
    %12 = arith.addf %9, %11 : vector<8x128xf32>
    %c0_11 = arith.constant 0 : index
    %c0_12 = arith.constant 0 : index
    %13 = vector.load %arg5[%c0_11, %c0_12] : memref<8x128xf32, #tpu.memory_space<vmem>>, vector<8x128xf32>
    tpu.vector_store %arg5[%c0_11, %c0_12], %12 {strides = array<i32>} : memref<8x128xf32, #tpu.memory_space<vmem>>, vector<8x128xf32>,
    return
  }
}

</mosaic_0001>

<llo_original>
// kernel: tpu_custom_call.1
$region0: #{tpu_custom_call.1}
  #allocation0 [shape = 'u32[]', space=smem, size = 0x4, offset = 0x4, fixed_abs, tag = 'smem constant byte address 0x4 - core index']
  #allocation1 [shape = 'u32[144,128]{1,0:T(1,128)}', space=vmem, size = 0x12000, scoped, tag = 'internal scratch']
  %s0 = inlined_call_operand.hbm [shape: f32[8,16], index: 0, kind: input, shape index: {}]
  %s1 = inlined_call_operand.hbm [shape: f32[16,256], index: 1, kind: input, shape index: {}]
  %s2 = inlined_call_operand.vmem [shape: f32[1,256], index: 2, kind: input, shape index: {}]
  %s3 = inlined_call_operand.hbm [shape: f32[256,128], index: 3, kind: input, shape index: {}]
  %s4 = inlined_call_operand.vmem [shape: f32[1,128], index: 4, kind: input, shape index: {}]
  %s5 = inlined_call_operand.hbm [shape: f32[8,128], index: 5, kind: output, shape index: {}]
  %s6 = sld [smem:[#allocation0]]
  $region42: #{tpu_custom_call.1} parent=0
    _
  %s8 = ssub.s32 1, %s6
  %s9 = scalar_select 0, %s8, %s6
  $region1: #{tpu_custom_call.1} parent=0
    #allocation2 [shape = 'u8[4096]{0}', space=vmem, size = 0x1000, scoped, tag = 'input window, operand 0, single buffered']
    #allocation3 [shape = 's32[1]{0}', space=sflag, size = 0x4, scoped, tag = 'scoped memory for tpu_custom_call.1']
    #allocation4 [shape = 's32[1]{0}', space=sflag, size = 0x4, scoped, tag = 'scoped memory for tpu_custom_call.1']
    #allocation5 [shape = 'u8[16384]{0}', space=vmem, size = 0x4000, scoped, tag = 'input window, operand 1, single buffered']
    #allocation6 [shape = 's32[1]{0}', space=sflag, size = 0x4, scoped, tag = 'scoped memory for tpu_custom_call.1']
    #allocation7 [shape = 'u8[131072]{0}', space=vmem, size = 0x20000, scoped, tag = 'input window, operand 3, single buffered']
    #allocation8 [shape = 'u8[4096]{0}', space=vmem, size = 0x1000, scoped, tag = 'output window, operand 0, single buffered']
    %10 = vsyncpa [#allocation3], 0
    %11 = vsyncpa [#allocation6], 0
    %12 = vsyncpa [#allocation4], 0
    // Predicated region
    $region2: #{tpu_custom_call.1} parent=1 // pred_check
      _
    $region3: #{tpu_custom_call.1} parent=1 // pred_check_branch
      %14 = sbr.rel (0) target = $region5
    $region4: #{tpu_custom_call.1} parent=1 // pred_region
      %s16 = ssub.s32 128, 128
      %17 = vsyncadd [#allocation3], %s16
      %s19 = sshll.u32 [#allocation2], 4
      %s20 = int_to_ptr.vmem [resolvable:$true] %s19
      %22 = dma.hbm_to_vmem [thread:$0]  %s0, 128, %s20, [#allocation3]
    $region5: #{tpu_custom_call.1} parent=1 // pred_fallthru
      _
    // Predicated region
    $region6: #{tpu_custom_call.1} parent=1 // pred_check
      _
    $region7: #{tpu_custom_call.1} parent=1 // pred_check_branch
      %24 = sbr.rel (0) target = $region9
    $region8: #{tpu_custom_call.1} parent=1 // pred_region
      %s26 = ssub.s32 512, 512
      %27 = vsyncadd [#allocation6], %s26
      %s28 = sshll.u32 [#allocation5], 4
      %s29 = int_to_ptr.vmem [resolvable:$true] %s28
      %34 = dma.hbm_to_vmem [thread:$0]  %s1, 512, %s29, [#allocation6], 256, 256, 16
    $region9: #{tpu_custom_call.1} parent=1 // pred_fallthru
      _
    // Predicated region
    $region10: #{tpu_custom_call.1} parent=1 // pred_check
      _
    $region11: #{tpu_custom_call.1} parent=1 // pred_check_branch
      %36 = sbr.rel (0) target = $region13
    $region12: #{tpu_custom_call.1} parent=1 // pred_region
      _
    $region13: #{tpu_custom_call.1} parent=1 // pred_fallthru
      _
    // Predicated region
    $region14: #{tpu_custom_call.1} parent=1 // pred_check
      _
    $region15: #{tpu_custom_call.1} parent=1 // pred_check_branch
      %38 = sbr.rel (0) target = $region17
    $region16: #{tpu_custom_call.1} parent=1 // pred_region
      %s40 = ssub.s32 4096, 4096
      %41 = vsyncadd [#allocation6], %s40
      %s42 = sshll.u32 [#allocation7], 4
      %s43 = int_to_ptr.vmem [resolvable:$true] %s42
      %48 = dma.hbm_to_vmem [thread:$0]  %s3, 4096, %s43, [#allocation6], 128, 128, 8
    $region17: #{tpu_custom_call.1} parent=1 // pred_fallthru
      _
    // Predicated region
    $region18: #{tpu_custom_call.1} parent=1 // pred_check
      _
    $region19: #{tpu_custom_call.1} parent=1 // pred_check_branch
      %50 = sbr.rel (0) target = $region21
    $region20: #{tpu_custom_call.1} parent=1 // pred_region
      _
    $region21: #{tpu_custom_call.1} parent=1 // pred_fallthru
      _
    // Predicated region
    $region22: #{tpu_custom_call.1} parent=1 // pred_check
      _
    $region23: #{tpu_custom_call.1} parent=1 // pred_check_branch
      %52 = sbr.rel (0) target = $region25
    $region24: #{tpu_custom_call.1} parent=1 // pred_region
      %53 = dma.done [#allocation3], 128
    $region25: #{tpu_custom_call.1} parent=1 // pred_fallthru
      _
    // Predicated region
    $region26: #{tpu_custom_call.1} parent=1 // pred_check
      _
    $region27: #{tpu_custom_call.1} parent=1 // pred_check_branch
      %55 = sbr.rel (0) target = $region29
    $region28: #{tpu_custom_call.1} parent=1 // pred_region
      %56 = dma.done [#allocation6], 512
    $region29: #{tpu_custom_call.1} parent=1 // pred_fallthru
      _
    // Predicated region
    $region30: #{tpu_custom_call.1} parent=1 // pred_check
      _
    $region31: #{tpu_custom_call.1} parent=1 // pred_check_branch
      %58 = sbr.rel (0) target = $region33
    $region32: #{tpu_custom_call.1} parent=1 // pred_region
      %59 = dma.done [#allocation6], 4096
    $region33: #{tpu_custom_call.1} parent=1 // pred_fallthru
      _
    %v60 = vld [vmem:[#allocation2] sm:$0xff]
    %v61 = vld [vmem:[#allocation5] sm:$0xff]
    %v62 = vld [vmem:[#allocation5 + $0x8] sm:$0xff]
    %v63 = vld [vmem:[#allocation5 + $0x10] sm:$0xff]
    %v64 = vld [vmem:[#allocation5 + $0x18] sm:$0xff]
    %v65 = vld [vmem:[%s2] sm:$0x3]
    %v67 = vlaneseq
    %v68 = vshrl.u32 %v67, 7
    %v69 = vsub.s32 0, %v68
    %v70 = vrot.slane %v65, %v69
    %v71 = vlaneseq
    %v72 = vshrl.u32 %v71, 7
    %v73 = vsub.s32 1, %v72
    %v74 = vrot.slane %v65, %v73
    %vm77 = vcmask 130048
    %v79 = vsel %vm77, %v60, 0
    %81 = vmatprep.subr.mxu0 0.0
    %82 = vmatpush1.msra.mxu0 0.0
    %83 = vmatprep.subr.mxu0 0.0
    %84 = vmatpush1.msra.mxu0 0.0
    %85 = vmatprep.subr.mxu0 0.0
    %86 = vmatpush1.msra.mxu0 0.0
    %87 = vmatprep.subr.mxu0 0.0
    %88 = vmatpush1.msra.mxu0 0.0
    %89 = vmatprep.subr.mxu0 0.0
    %90 = vmatpush1.msra.mxu0 0.0
    %91 = vmatprep.subr.mxu0 0.0
    %92 = vmatpush1.msra.mxu0 0.0
    %93 = vmatprep.subr.mxu0 0.0
    %94 = vmatpush1.msra.mxu0 0.0
    %95 = vmatprep.subr.mxu0 0.0
    %96 = vmatpush1.msra.mxu0 0.0
    %97 = vmatprep.subr.mxu0 0.0
    %98 = vmatpush1.msra.mxu0 0.0
    %99 = vmatprep.subr.mxu0 0.0
    %100 = vmatpush1.msra.mxu0 0.0
    %101 = vmatprep.subr.mxu0 0.0
    %102 = vmatpush1.msra.mxu0 0.0
    %103 = vmatprep.subr.mxu0 0.0
    %104 = vmatpush1.msra.mxu0 0.0
    %105 = vmatprep.subr.mxu0 0.0
    %106 = vmatpush1.msra.mxu0 0.0
    %107 = vmatprep.subr.mxu0 0.0
    %108 = vmatpush1.msra.mxu0 0.0
    %109 = vmatprep.subr.mxu0 %v64
    %110 = vmatpush1.msra.mxu0 %v63
    %111 = vmatprep.subr.mxu0 %v62
    %112 = vmatpush1.msra.mxu0 %v61
    %113 = vmatprep.subr.mxu0 0.0
    %114 = vmatpush2.msra.mxu0 0.0
    %115 = vmatprep.subr.mxu0 0.0
    %116 = vmatpush2.msra.mxu0 0.0
    %117 = vmatprep.subr.mxu0 0.0
    %118 = vmatpush2.msra.mxu0 0.0
    %119 = vmatprep.subr.mxu0 0.0
    %120 = vmatpush2.msra.mxu0 0.0
    %121 = vmatprep.subr.mxu0 0.0
    %122 = vmatpush2.msra.mxu0 0.0
    %123 = vmatprep.subr.mxu0 0.0
    %124 = vmatpush2.msra.mxu0 0.0
    %125 = vmatprep.subr.mxu0 0.0
    %126 = vmatpush2.msra.mxu0 0.0
    %127 = vmatprep.subr.mxu0 0.0
    %128 = vmatpush2.msra.mxu0 0.0
    %129 = vmatprep.subr.mxu0 0.0
    %130 = vmatpush2.msra.mxu0 0.0
    %131 = vmatprep.subr.mxu0 0.0
    %132 = vmatpush2.msra.mxu0 0.0
    %133 = vmatprep.subr.mxu0 0.0
    %134 = vmatpush2.msra.mxu0 0.0
    %135 = vmatprep.subr.mxu0 0.0
    %136 = vmatpush2.msra.mxu0 0.0
    %137 = vmatprep.subr.mxu0 0.0
    %138 = vmatpush2.msra.mxu0 0.0
    %139 = vmatprep.subr.mxu0 0.0
    %140 = vmatpush2.msra.mxu0 0.0
    %141 = vmatprep.subr.mxu0 0.0
    %142 = vmatpush2.msra.mxu0 0.0
    %143 = vmatprep.subr.mxu0 0.0
    %144 = vmatpush2.msra.mxu0 0.0
    %145 = vmatprep.mubr.f32.mxu0 0.0
    %146 = vmatmul.mubr.f32.gmra.mxu0 %v79
    %v147 = vpop.f32.mrf.mxu0
    %v148 = vadd.f32 %v70, %v147
    %v149 = vpop.f32.mrf.mxu0
    %v150 = vadd.f32 %v74, %v149
    %151 = vdwg.mxu0
    %v152 = vmax.f32 %v148, 0.0
    %v153 = vmax.f32 %v150, 0.0
    %v154 = vld [vmem:[#allocation7] sm:$0xff]
    %v155 = vld [vmem:[#allocation7 + $0x8] sm:$0xff]
    %v156 = vld [vmem:[#allocation7 + $0x10] sm:$0xff]
    %v157 = vld [vmem:[#allocation7 + $0x18] sm:$0xff]
    %v158 = vld [vmem:[#allocation7 + $0x20] sm:$0xff]
    %v159 = vld [vmem:[#allocation7 + $0x28] sm:$0xff]
    %v160 = vld [vmem:[#allocation7 + $0x30] sm:$0xff]
    %v161 = vld [vmem:[#allocation7 + $0x38] sm:$0xff]
    %v162 = vld [vmem:[#allocation7 + $0x40] sm:$0xff]
    %v163 = vld [vmem:[#allocation7 + $0x48] sm:$0xff]
    %v164 = vld [vmem:[#allocation7 + $0x50] sm:$0xff]
    %v165 = vld [vmem:[#allocation7 + $0x58] sm:$0xff]
    %v166 = vld [vmem:[#allocation7 + $0x60] sm:$0xff]
    %v167 = vld [vmem:[#allocation7 + $0x68] sm:$0xff]
    %v168 = vld [vmem:[#allocation7 + $0x70] sm:$0xff]
    %v169 = vld [vmem:[#allocation7 + $0x78] sm:$0xff]
    %v170 = vld [vmem:[#allocation7 + $0x80] sm:$0xff]
    %v171 = vld [vmem:[#allocation7 + $0x88] sm:$0xff]
    %v172 = vld [vmem:[#allocation7 + $0x90] sm:$0xff]
    %v173 = vld [vmem:[#allocation7 + $0x98] sm:$0xff]
    %v174 = vld [vmem:[#allocation7 + $0xa0] sm:$0xff]
    %v175 = vld [vmem:[#allocation7 + $0xa8] sm:$0xff]
    %v176 = vld [vmem:[#allocation7 + $0xb0] sm:$0xff]
    %v177 = vld [vmem:[#allocation7 + $0xb8] sm:$0xff]
    %v178 = vld [vmem:[#allocation7 + $0xc0] sm:$0xff]
    %v179 = vld [vmem:[#allocation7 + $0xc8] sm:$0xff]
    %v180 = vld [vmem:[#allocation7 + $0xd0] sm:$0xff]
    %v181 = vld [vmem:[#allocation7 + $0xd8] sm:$0xff]
    %v182 = vld [vmem:[#allocation7 + $0xe0] sm:$0xff]
    %v183 = vld [vmem:[#allocation7 + $0xe8] sm:$0xff]
    %v184 = vld [vmem:[#allocation7 + $0xf0] sm:$0xff]
    %v185 = vld [vmem:[#allocation7 + $0xf8] sm:$0xff]
    %v186 = vld [vmem:[%s4] sm:$0x1]
    %v188 = vlaneseq
    %v189 = vshrl.u32 %v188, 7
    %v190 = vsub.s32 0, %v189
    %v191 = vrot.slane %v186, %v190
    %193 = vmatprep.subr.mxu0 0.0
    %194 = vmatpush1.msra.mxu0 %v169
    %195 = vmatprep.subr.mxu0 0.0
    %196 = vmatpush1.msra.mxu0 %v168
    %197 = vmatprep.subr.mxu0 0.0
    %198 = vmatpush1.msra.mxu0 %v167
    %199 = vmatprep.subr.mxu0 0.0
    %200 = vmatpush1.msra.mxu0 %v166
    %201 = vmatprep.subr.mxu0 0.0
    %202 = vmatpush1.msra.mxu0 %v165
    %203 = vmatprep.subr.mxu0 0.0
    %204 = vmatpush1.msra.mxu0 %v164
    %205 = vmatprep.subr.mxu0 0.0
    %206 = vmatpush1.msra.mxu0 %v163
    %207 = vmatprep.subr.mxu0 0.0
    %208 = vmatpush1.msra.mxu0 %v162
    %209 = vmatprep.subr.mxu0 0.0
    %210 = vmatpush1.msra.mxu0 %v161
    %211 = vmatprep.subr.mxu0 0.0
    %212 = vmatpush1.msra.mxu0 %v160
    %213 = vmatprep.subr.mxu0 0.0
    %214 = vmatpush1.msra.mxu0 %v159
    %215 = vmatprep.subr.mxu0 0.0
    %216 = vmatpush1.msra.mxu0 %v158
    %217 = vmatprep.subr.mxu0 0.0
    %218 = vmatpush1.msra.mxu0 %v157
    %219 = vmatprep.subr.mxu0 0.0
    %220 = vmatpush1.msra.mxu0 %v156
    %221 = vmatprep.subr.mxu0 0.0
    %222 = vmatpush1.msra.mxu0 %v155
    %223 = vmatprep.subr.mxu0 0.0
    %224 = vmatpush1.msra.mxu0 %v154
    %225 = vmatprep.subr.mxu0 0.0
    %226 = vmatpush2.msra.mxu0 %v185
    %227 = vmatprep.subr.mxu0 0.0
    %228 = vmatpush2.msra.mxu0 %v184
    %229 = vmatprep.subr.mxu0 0.0
    %230 = vmatpush2.msra.mxu0 %v183
    %231 = vmatprep.subr.mxu0 0.0
    %232 = vmatpush2.msra.mxu0 %v182
    %233 = vmatprep.subr.mxu0 0.0
    %234 = vmatpush2.msra.mxu0 %v181
    %235 = vmatprep.subr.mxu0 0.0
    %236 = vmatpush2.msra.mxu0 %v180
    %237 = vmatprep.subr.mxu0 0.0
    %238 = vmatpush2.msra.mxu0 %v179
    %239 = vmatprep.subr.mxu0 0.0
    %240 = vmatpush2.msra.mxu0 %v178
    %241 = vmatprep.subr.mxu0 0.0
    %242 = vmatpush2.msra.mxu0 %v177
    %243 = vmatprep.subr.mxu0 0.0
    %244 = vmatpush2.msra.mxu0 %v176
    %245 = vmatprep.subr.mxu0 0.0
    %246 = vmatpush2.msra.mxu0 %v175
    %247 = vmatprep.subr.mxu0 0.0
    %248 = vmatpush2.msra.mxu0 %v174
    %249 = vmatprep.subr.mxu0 0.0
    %250 = vmatpush2.msra.mxu0 %v173
    %251 = vmatprep.subr.mxu0 0.0
    %252 = vmatpush2.msra.mxu0 %v172
    %253 = vmatprep.subr.mxu0 0.0
    %254 = vmatpush2.msra.mxu0 %v171
    %255 = vmatprep.subr.mxu0 0.0
    %256 = vmatpush2.msra.mxu0 %v170
    %257 = vmatprep.mubr.f32.mxu0 %v153
    %258 = vmatmul.mubr.f32.gmra.mxu0 %v152
    %v259 = vpop.f32.mrf.mxu0
    %v260 = vadd.f32 %v191, %v259
    %v261 = vpop.f32.mrf.mxu0
    %262 = vdwg.mxu0
    %263 = vst [vmem:[#allocation8] sm:$0xff] %v260
    // Predicated region
    $region34: #{tpu_custom_call.1} parent=1 // pred_check
      _
    $region35: #{tpu_custom_call.1} parent=1 // pred_check_branch
      %265 = sbr.rel (0) target = $region37
    $region36: #{tpu_custom_call.1} parent=1 // pred_region
      %s267 = ssub.s32 128, 128
      %268 = vsyncadd [#allocation4], %s267
      %s270 = sshll.u32 [#allocation8], 4
      %s271 = int_to_ptr.vmem [resolvable:$true] %s270
      %273 = dma.vmem_to_hbm [thread:$0]  %s271, 128, %s5, [#allocation4]
    $region37: #{tpu_custom_call.1} parent=1 // pred_fallthru
      _
    // Predicated region
    $region38: #{tpu_custom_call.1} parent=1 // pred_check
      _
    $region39: #{tpu_custom_call.1} parent=1 // pred_check_branch
      %275 = sbr.rel (0) target = $region41
    $region40: #{tpu_custom_call.1} parent=1 // pred_region
      %276 = dma.done [#allocation4], 128
    $region41: #{tpu_custom_call.1} parent=1 // pred_fallthru
      _
    %277 = vsyncpa [#allocation3], 1
    %278 = vsyncpa [#allocation6], 1
    %279 = vsyncpa [#allocation4], 1

</llo_original>
